<compile_context>
chip_gen: v5e
topology: v5e:2x2
jax: 0.10.0
libtpu: 0.0.40
codegen_flags: <defaults>
</compile_context>

<pallas_src>
import functools

import jax
import jax.numpy as jnp
from jax import lax
from jax.experimental import pallas as pl
from jax.experimental.pallas import tpu as pltpu


def _dropblock_kernel(x_ref, bits_ref, y_ref, sums_ref, *, thresh, H, W, pad):
    """One (tile_rows, H*W) tile: bernoulli -> separable max-pool -> mask*x.

    Each row of the tile is one flattened (H*W) image, so the pooling is fully
    contained in the tile.
    """
    # --- bernoulli(gamma): single unsigned-integer compare -------------------
    bern = (bits_ref[...] < jnp.uint32(thresh)).astype(jnp.float32)

    # --- separable block_size x block_size max pool (stride 1, padding=pad) --
    # Flattened index f = h*W + w along the lane axis.  Out-of-bounds
    # neighbours are masked to 0, which equals PyTorch's implicit -inf padding
    # because pooled values are in {0, 1}.
    idx = lax.broadcasted_iota(jnp.int32, bern.shape, 1)
    col = idx % W                                    # w coordinate

    rowmax = bern                                    # max over the W direction
    for d in range(1, pad + 1):
        left = jnp.where(col >= d, jnp.roll(bern, d, axis=1), 0.0)
        right = jnp.where(col < W - d, jnp.roll(bern, -d, axis=1), 0.0)
        rowmax = jnp.maximum(rowmax, jnp.maximum(left, right))

    pooled = rowmax                                  # max over the H direction
    for d in range(1, pad + 1):
        up = jnp.where(idx >= d * W, jnp.roll(rowmax, d * W, axis=1), 0.0)
        down = jnp.where(idx < (H - d) * W, jnp.roll(rowmax, -d * W, axis=1), 0.0)
        pooled = jnp.maximum(pooled, jnp.maximum(up, down))

    # --- apply mask; emit per-tile mask sum for the global renormalization ---
    mask = 1.0 - pooled
    y_ref[...] = (mask * x_ref[...]).astype(y_ref.dtype)
    sums_ref[pl.program_id(0)] = jnp.sum(mask)


def _pick_tile_rows(rows, lane, itemsize=4, budget_bytes=4 << 20):
    """Largest row tile (multiple of 8, divisor of rows) within a VMEM budget.

    Budget is per operand block; with 3 tensor operands x 2 pipeline buffers
    this stays comfortably under v7x's 32 MiB scoped-VMEM default.
    """
    budget_rows = max(1, budget_bytes // (itemsize * lane))
    if rows <= budget_rows:
        return rows
    t = (budget_rows // 8) * 8
    while t > 0 and rows % t:
        t -= 8
    return t if t > 0 else rows


def dropblock_forward(x, key, *, block_size=3, keep_prob=0.9):
    """DropBlock forward.  x: f32[N, C, H, W] (NCHW), key: jax PRNG key."""
    if block_size % 2 != 1:
        # PyTorch's max_pool2d(kernel, stride=1, padding=block_size//2) only
        # preserves the HxW shape for odd block_size; mirror that restriction.
        raise ValueError("block_size must be odd")
    N, C, H, W = x.shape
    pad = block_size // 2

    # gamma exactly as DropBlock.calculate_gamma (uses x.shape[-1] == W).
    gamma = (1.0 - keep_prob) * (W ** 2) / (
        block_size ** 2 * (W - block_size + 1) ** 2)
    thresh = min(int(gamma * (1 << 32)), (1 << 32) - 1)  # P(bits < thresh) == gamma

    R, L = N * C, H * W                      # lane-dense flattened view
    x2 = x.reshape(R, L)
    bits = jax.random.bits(key, (R, L), dtype=jnp.uint32)

    tile_rows = _pick_tile_rows(R, L, x.dtype.itemsize)
    grid = (R // tile_rows,)

    kernel = functools.partial(_dropblock_kernel, thresh=thresh, H=H, W=W, pad=pad)
    tile_spec = pl.BlockSpec((tile_rows, L), lambda i: (i, 0))

    y2, tile_sums = pl.pallas_call(
        kernel,
        grid=grid,
        in_specs=[tile_spec, tile_spec],
        out_specs=(tile_spec,
                   pl.BlockSpec(memory_space=pltpu.MemorySpace.SMEM)),
        out_shape=(jax.ShapeDtypeStruct((R, L), x.dtype),
                   jax.ShapeDtypeStruct((grid[0],), jnp.float32)),
    )(x2, bits)

    # Global renormalization: numel / sum(mask), guarded against an
    # all-dropped mask.  Single scalar broadcast multiply in the XLA epilogue.
    scale = jnp.float32(R * L) / jnp.maximum(jnp.sum(tile_sums), 1.0)
    return (y2 * scale).reshape(N, C, H, W)


if __name__ == "__main__":
    key = jax.random.PRNGKey(0)
    kx, kb = jax.random.split(key)
    x = jax.random.normal(kx, (2, 4, 16, 16), dtype=jnp.float32)

    y = dropblock_forward(x, kb, block_size=3, keep_prob=0.9)
    y = jax.block_until_ready(y)

    assert y.shape == x.shape and y.dtype == x.dtype
    assert bool(jnp.all(jnp.isfinite(y)))
    print("KERNEL_OK")
</pallas_src>

<mosaic_0001>
module attributes {stable_mosaic.version = 11 : i64} {
  func.func @_dropblock_kernel(%arg0: i32, %arg1: memref<8x256xf32, #tpu.memory_space<vmem>>, %arg2: memref<8x256xi32, #tpu.memory_space<vmem>>, %arg3: memref<8x256xf32, #tpu.memory_space<vmem>>, %arg4: memref<1xf32, #tpu.memory_space<smem>>) attributes {dimension_semantics = [#tpu.dimension_semantics<arbitrary>], iteration_bounds = array<i64: 1>, scalar_prefetch = 0 : i64, scratch_operands = 0 : i64, tpu.core_type = #tpu.core_type<tc>, window_params = [{transform_indices = @transform_0, window_bounds = array<i64: 8, 256>}, {transform_indices = @transform_1, window_bounds = array<i64: 8, 256>}, {transform_indices = @transform_2, window_bounds = array<i64: 8, 256>}, {transform_indices = @transform_3, window_bounds = array<i64: 1>}]} {
    %c0 = arith.constant 0 : index
    %c0_0 = arith.constant 0 : index
    %0 = vector.load %arg2[%c0, %c0_0] : memref<8x256xi32, #tpu.memory_space<vmem>>, vector<8x256xi32>
    %c62330591_i32 = arith.constant 62330591 : i32
    %1 = vector.broadcast %c62330591_i32 : i32 to vector<8x256xi32>
    %2 = arith.cmpi ult, %0, %1 : vector<8x256xi32>
    %3 = arith.extui %2 : vector<8x256xi1> to vector<8x256xi32>
    %4 = arith.sitofp %3 : vector<8x256xi32> to vector<8x256xf32>
    %5 = tpu.iota {dimensions = array<i32: 1>} : vector<8x256xi32>
    %c16_i32 = arith.constant 16 : i32
    %c0_i32 = arith.constant 0 : i32
    %6 = arith.cmpi eq, %c16_i32, %c0_i32 : i32
    %c1_i32 = arith.constant 1 : i32
    %7 = arith.select %6, %c1_i32, %c16_i32 : i32
    %8 = vector.broadcast %7 : i32 to vector<8x256xi32>
    %9 = arith.remsi %5, %8 : vector<8x256xi32>
    %c0_i32_1 = arith.constant 0 : i32
    %10 = vector.broadcast %c0_i32_1 : i32 to vector<8x256xi32>
    %11 = arith.cmpi ne, %9, %10 : vector<8x256xi32>
    %c0_i32_2 = arith.constant 0 : i32
    %12 = vector.broadcast %c0_i32_2 : i32 to vector<8x256xi32>
    %13 = arith.cmpi slt, %9, %12 : vector<8x256xi32>
    %c0_i32_3 = arith.constant 0 : i32
    %14 = arith.cmpi slt, %7, %c0_i32_3 : i32
    %15 = vector.broadcast %14 : i1 to vector<8x256xi1>
    %16 = vector.broadcast %15 : vector<8x256xi1> to vector<8x256xi1>
    %17 = arith.xori %13, %16 : vector<8x256xi1>
    %18 = arith.andi %17, %11 : vector<8x256xi1>
    %19 = vector.broadcast %7 : i32 to vector<8x256xi32>
    %20 = arith.addi %9, %19 : vector<8x256xi32>
    %21 = arith.select %18, %20, %9 : vector<8x256xi1>, vector<8x256xi32>
    %c1_i32_4 = arith.constant 1 : i32
    %22 = vector.broadcast %c1_i32_4 : i32 to vector<8x256xi32>
    %23 = arith.cmpi sge, %21, %22 : vector<8x256xi32>
    %24 = vector.extract_strided_slice %4 {offsets = [0, 255], sizes = [8, 1], strides = [1, 1]} : vector<8x256xf32> to vector<8x1xf32>
    %25 = vector.extract_strided_slice %4 {offsets = [0, 0], sizes = [8, 255], strides = [1, 1]} : vector<8x256xf32> to vector<8x255xf32>
    %26 = tpu.concatenate %24, %25 in 1 : vector<8x1xf32>, vector<8x255xf32> -> vector<8x256xf32>
    %cst = arith.constant 0.000000e+00 : f32
    %27 = vector.broadcast %cst : f32 to vector<8x256xf32>
    %28 = arith.select %23, %26, %27 : vector<8x256xi1>, vector<8x256xf32>
    %c15_i32 = arith.constant 15 : i32
    %29 = vector.broadcast %c15_i32 : i32 to vector<8x256xi32>
    %30 = arith.cmpi slt, %21, %29 : vector<8x256xi32>
    %31 = vector.extract_strided_slice %4 {offsets = [0, 1], sizes = [8, 255], strides = [1, 1]} : vector<8x256xf32> to vector<8x255xf32>
    %32 = vector.extract_strided_slice %4 {offsets = [0, 0], sizes = [8, 1], strides = [1, 1]} : vector<8x256xf32> to vector<8x1xf32>
    %33 = tpu.concatenate %31, %32 in 1 : vector<8x255xf32>, vector<8x1xf32> -> vector<8x256xf32>
    %cst_5 = arith.constant 0.000000e+00 : f32
    %34 = vector.broadcast %cst_5 : f32 to vector<8x256xf32>
    %35 = arith.select %30, %33, %34 : vector<8x256xi1>, vector<8x256xf32>
    %36 = arith.maximumf %28, %35 : vector<8x256xf32>
    %37 = arith.maximumf %4, %36 : vector<8x256xf32>
    %c16_i32_6 = arith.constant 16 : i32
    %38 = vector.broadcast %c16_i32_6 : i32 to vector<8x256xi32>
    %39 = arith.cmpi sge, %5, %38 : vector<8x256xi32>
    %40 = vector.extract_strided_slice %37 {offsets = [0, 240], sizes = [8, 16], strides = [1, 1]} : vector<8x256xf32> to vector<8x16xf32>
    %41 = vector.extract_strided_slice %37 {offsets = [0, 0], sizes = [8, 240], strides = [1, 1]} : vector<8x256xf32> to vector<8x240xf32>
    %42 = tpu.concatenate %40, %41 in 1 : vector<8x16xf32>, vector<8x240xf32> -> vector<8x256xf32>
    %cst_7 = arith.constant 0.000000e+00 : f32
    %43 = vector.broadcast %cst_7 : f32 to vector<8x256xf32>
    %44 = arith.select %39, %42, %43 : vector<8x256xi1>, vector<8x256xf32>
    %c240_i32 = arith.constant 240 : i32
    %45 = vector.broadcast %c240_i32 : i32 to vector<8x256xi32>
    %46 = arith.cmpi slt, %5, %45 : vector<8x256xi32>
    %47 = vector.extract_strided_slice %37 {offsets = [0, 16], sizes = [8, 240], strides = [1, 1]} : vector<8x256xf32> to vector<8x240xf32>
    %48 = vector.extract_strided_slice %37 {offsets = [0, 0], sizes = [8, 16], strides = [1, 1]} : vector<8x256xf32> to vector<8x16xf32>
    %49 = tpu.concatenate %47, %48 in 1 : vector<8x240xf32>, vector<8x16xf32> -> vector<8x256xf32>
    %cst_8 = arith.constant 0.000000e+00 : f32
    %50 = vector.broadcast %cst_8 : f32 to vector<8x256xf32>
    %51 = arith.select %46, %49, %50 : vector<8x256xi1>, vector<8x256xf32>
    %52 = arith.maximumf %44, %51 : vector<8x256xf32>
    %53 = arith.maximumf %37, %52 : vector<8x256xf32>
    %cst_9 = arith.constant 1.000000e+00 : f32
    %54 = vector.broadcast %cst_9 : f32 to vector<8x256xf32>
    %55 = arith.subf %54, %53 : vector<8x256xf32>
    %c0_10 = arith.constant 0 : index
    %c0_11 = arith.constant 0 : index
    %56 = vector.load %arg1[%c0_10, %c0_11] : memref<8x256xf32, #tpu.memory_space<vmem>>, vector<8x256xf32>
    %57 = arith.mulf %55, %56 : vector<8x256xf32>
    %c0_12 = arith.constant 0 : index
    %c0_13 = arith.constant 0 : index
    %58 = vector.load %arg3[%c0_12, %c0_13] : memref<8x256xf32, #tpu.memory_space<vmem>>, vector<8x256xf32>
    tpu.vector_store %arg3[%c0_12, %c0_13], %57 {strides = array<i32>} : memref<8x256xf32, #tpu.memory_space<vmem>>, vector<8x256xf32>,
    %59 = vector.shape_cast %55 : vector<8x256xf32> to vector<1x8x256xf32>
    %cst_14 = arith.constant dense<0.000000e+00> : vector<1xf32>
    %60 = vector.multi_reduction <add>, %59, %cst_14 [1, 2] : vector<1x8x256xf32> to vector<1xf32>
    %61 = vector.shape_cast %60 : vector<1xf32> to vector<1x1x1xf32>
    %62 = vector.extract %61[0, 0, 0] : f32 from vector<1x1x1xf32>
    %63 = arith.index_cast %arg0 : i32 to index
    %64 = memref.load %arg4[%63] : memref<1xf32, #tpu.memory_space<smem>>
    memref.store %62, %arg4[%63] : memref<1xf32, #tpu.memory_space<smem>>
    return
  }
  func.func @transform_0(%arg0: i32) -> (i32, i32) {
    %c0_i32 = arith.constant 0 : i32
    %c0_i32_0 = arith.constant 0 : i32
    return %arg0, %c0_i32 : i32, i32
  }
  func.func @transform_1(%arg0: i32) -> (i32, i32) {
    %c0_i32 = arith.constant 0 : i32
    %c0_i32_0 = arith.constant 0 : i32
    return %arg0, %c0_i32 : i32, i32
  }
  func.func @transform_2(%arg0: i32) -> (i32, i32) {
    %c0_i32 = arith.constant 0 : i32
    %c0_i32_0 = arith.constant 0 : i32
    return %arg0, %c0_i32 : i32, i32
  }
  func.func @transform_3(%arg0: i32) -> i32 {
    %c0_i32 = arith.constant 0 : i32
    %c0_i32_0 = arith.constant 0 : i32
    return %c0_i32 : i32
  }
}

</mosaic_0001>

<llo_original>
// kernel: tpu_custom_call.1
$region0: #{tpu_custom_call.1}
  #allocation0 [shape = 'u32[]', space=smem, size = 0x4, offset = 0x4, fixed_abs, tag = 'smem constant byte address 0x4 - core index']
  #allocation1 [shape = 'u32[72,128]{1,0:T(1,128)}', space=vmem, size = 0x9000, scoped, tag = 'internal scratch']
  %s0 = inlined_call_operand.hbm [shape: f32[8,256], index: 0, kind: input, shape index: {}]
  %s1 = inlined_call_operand.hbm [shape: u32[8,256], index: 1, kind: input, shape index: {}]
  %s2 = inlined_call_operand.hbm [shape: f32[8,256], index: 2, kind: output, shape index: {0}]
  %s3 = inlined_call_operand.hbm [shape: f32[1], index: 3, kind: output, shape index: {1}]
  %4 = xla_tuple %s2, %s3
  %s5 = sld [smem:[#allocation0]]
  $region34: #{tpu_custom_call.1} parent=0
    _
  %s7 = ssub.s32 1, %s5
  %s8 = scalar_select 0, %s7, %s5
  $region1: #{tpu_custom_call.1} parent=0
    #allocation2 [shape = 'u8[8192]{0}', space=vmem, size = 0x2000, scoped, tag = 'input window, operand 0, single buffered']
    #allocation3 [shape = 's32[1]{0}', space=sflag, size = 0x4, scoped, tag = 'scoped memory for tpu_custom_call.1']
    #allocation4 [shape = 's32[1]{0}', space=sflag, size = 0x4, scoped, tag = 'scoped memory for tpu_custom_call.1']
    #allocation5 [shape = 's32[1]{0}', space=sflag, size = 0x4, scoped, tag = 'scoped memory for tpu_custom_call.1']
    #allocation6 [shape = 'u8[8192]{0}', space=vmem, size = 0x2000, scoped, tag = 'input window, operand 1, single buffered']
    #allocation7 [shape = 's32[1]{0}', space=sflag, size = 0x4, scoped, tag = 'scoped memory for tpu_custom_call.1']
    #allocation8 [shape = 'u8[8192]{0}', space=vmem, size = 0x2000, scoped, tag = 'output window, operand 0, single buffered']
    #allocation9 [shape = 'u8[512]{0}', space=smem, size = 0x200, scoped, tag = 'output window, operand 1, single buffered']
    %9 = vsyncpa [#allocation3], 0
    %10 = vsyncpa [#allocation7], 0
    %11 = vsyncpa [#allocation4], 0
    %12 = vsyncpa [#allocation5], 0
    // Predicated region
    $region2: #{tpu_custom_call.1} parent=1 // pred_check
      _
    $region3: #{tpu_custom_call.1} parent=1 // pred_check_branch
      %14 = sbr.rel (0) target = $region5
    $region4: #{tpu_custom_call.1} parent=1 // pred_region
      %16 = vsyncadd [#allocation3], 0
      %s18 = sshll.u32 %s0, 4
      %s19 = int_to_ptr.hbm [resolvable:$true] %s18
      %s20 = sshll.u32 [#allocation2], 4
      %s21 = int_to_ptr.vmem [resolvable:$true] %s20
      %23 = dma.hbm_to_vmem [thread:$0]  %s19, 256, %s21, [#allocation3]
    $region5: #{tpu_custom_call.1} parent=1 // pred_fallthru
      _
    // Predicated region
    $region6: #{tpu_custom_call.1} parent=1 // pred_check
      _
    $region7: #{tpu_custom_call.1} parent=1 // pred_check_branch
      %25 = sbr.rel (0) target = $region9
    $region8: #{tpu_custom_call.1} parent=1 // pred_region
      %27 = vsyncadd [#allocation7], 0
      %s29 = sshll.u32 %s1, 4
      %s30 = int_to_ptr.hbm [resolvable:$true] %s29
      %s31 = sshll.u32 [#allocation6], 4
      %s32 = int_to_ptr.vmem [resolvable:$true] %s31
      %34 = dma.hbm_to_vmem [thread:$0]  %s30, 256, %s32, [#allocation7]
    $region9: #{tpu_custom_call.1} parent=1 // pred_fallthru
      _
    // Predicated region
    $region10: #{tpu_custom_call.1} parent=1 // pred_check
      _
    $region11: #{tpu_custom_call.1} parent=1 // pred_check_branch
      %36 = sbr.rel (0) target = $region13
    $region12: #{tpu_custom_call.1} parent=1 // pred_region
      %38 = dma.done [#allocation3], 256
    $region13: #{tpu_custom_call.1} parent=1 // pred_fallthru
      _
    // Predicated region
    $region14: #{tpu_custom_call.1} parent=1 // pred_check
      _
    $region15: #{tpu_custom_call.1} parent=1 // pred_check_branch
      %40 = sbr.rel (0) target = $region17
    $region16: #{tpu_custom_call.1} parent=1 // pred_region
      %42 = dma.done [#allocation7], 256
    $region17: #{tpu_custom_call.1} parent=1 // pred_fallthru
      _
    %v43 = vld [vmem:[#allocation6] sm:$0xff]
    %v44 = vld [vmem:[#allocation6 + $0x8] sm:$0xff]
    %v45 = vadd.s32 %v43, 2147483648
    %vm47 = vcmp.lt.s32.totalorder %v45, 2209814239
    %v48 = vadd.s32 %v44, 2147483648
    %vm50 = vcmp.lt.s32.totalorder %v48, 2209814239
    %v51 = vsel %vm47, 1, 0
    %v52 = vsel %vm50, 1, 0
    %v53 = vcvt.s32.f32 %v51
    %v54 = vcvt.s32.f32 %v52
    %v55 = vlaneseq
    %v56 = vand.u32 %v55, 127
    %v57 = vadd.s32 %v56, 128
    %vm58 = vcmp.lt.s32.totalorder %v56, 0
    %v59 = vsub.s32 0, %v56
    %v60 = vsel %vm58, %v59, %v56
    %v61 = vshrl.u32 %v60, 4
    %v62 = vand.u32 %v60, 15
    %v63 = vsub.s32 0, %v62
    %v64 = vsel %vm58, %v63, %v62
    %vm65 = vcmp.lt.s32.totalorder %v57, 0
    %v66 = vsub.s32 0, %v57
    %v67 = vsel %vm65, %v66, %v57
    %v68 = vshrl.u32 %v67, 4
    %v69 = vand.u32 %v67, 15
    %v70 = vsub.s32 0, %v69
    %v71 = vsel %vm65, %v70, %v69
    %vm72 = vcmp.ne.s32.totalorder %v64, 0
    %vm73 = vcmp.ne.s32.totalorder %v71, 0
    %vm74 = vcmp.lt.s32.totalorder %v64, 0
    %vm75 = vcmp.lt.s32.totalorder %v71, 0
    %vm76 = vmand %vm74, %vm72
    %vm77 = vmand %vm75, %vm73
    %v78 = vadd.s32 %v64, 16
    %v79 = vadd.s32 %v71, 16
    %v80 = vsel %vm76, %v78, %v64
    %v81 = vsel %vm77, %v79, %v71
    %vm82 = vcmp.ge.s32.totalorder %v80, 1
    %vm83 = vcmp.ge.s32.totalorder %v81, 1
    %85 = vrot.lane.b32.xlu0 %v54, 1
    %v86 = vpop.permute.xlu0 %85
    %89 = vrot.lane.b32.xlu0 %v53, 1
    %v90 = vpop.permute.xlu0 %89
    %vm91 = vcmask 7168
    %v92 = vsel %vm91, %v90, %v86
    %v95 = vsel %vm91, %v86, %v90
    %v96 = vsel %vm82, %v95, 0.0
    %v97 = vsel %vm83, %v92, 0.0
    %vm98 = vcmp.lt.s32.totalorder %v80, 15
    %vm99 = vcmp.lt.s32.totalorder %v81, 15
    %100 = vrot.lane.b32.xlu0 %v53, 127
    %v101 = vpop.permute.xlu0 %100
    %102 = vrot.lane.b32.xlu0 %v54, 127
    %v103 = vpop.permute.xlu0 %102
    %vm104 = vcmask 1039360
    %v105 = vsel %vm104, %v101, %v103
    %v109 = vsel %vm104, %v103, %v101
    %v110 = vsel %vm98, %v105, 0.0
    %v111 = vsel %vm99, %v109, 0.0
    %v112 = vmax.f32 %v96, %v110
    %v113 = vmax.f32 %v97, %v111
    %v114 = vmax.f32 %v53, %v112
    %v115 = vmax.f32 %v54, %v113
    %vm116 = vcmp.ge.s32.totalorder %v56, 16
    %vm117 = vcmp.ge.s32.totalorder %v57, 16
    %119 = vrot.lane.b32.xlu0 %v115, 16
    %v120 = vpop.permute.xlu0 %119
    %123 = vrot.lane.b32.xlu0 %v114, 16
    %v124 = vpop.permute.xlu0 %123
    %vm125 = vcmask 130048
    %v126 = vsel %vm125, %v124, %v120
    %v129 = vsel %vm125, %v120, %v124
    %v130 = vsel %vm116, %v129, 0.0
    %v131 = vsel %vm117, %v126, 0.0
    %vm132 = vcmp.lt.s32.totalorder %v56, 240
    %vm133 = vcmp.lt.s32.totalorder %v57, 240
    %134 = vrot.lane.b32.xlu0 %v114, 112
    %v135 = vpop.permute.xlu0 %134
    %136 = vrot.lane.b32.xlu0 %v115, 112
    %v137 = vpop.permute.xlu0 %136
    %vm138 = vcmask 916480
    %v139 = vsel %vm138, %v135, %v137
    %v143 = vsel %vm138, %v137, %v135
    %v144 = vsel %vm132, %v139, 0.0
    %v145 = vsel %vm133, %v143, 0.0
    %v146 = vmax.f32 %v130, %v144
    %v147 = vmax.f32 %v131, %v145
    %v148 = vmax.f32 %v114, %v146
    %v149 = vmax.f32 %v115, %v147
    %v150 = vsub.f32 1.0, %v148
    %v151 = vsub.f32 1.0, %v149
    %v152 = vld [vmem:[#allocation2] sm:$0xff]
    %v153 = vld [vmem:[#allocation2 + $0x8] sm:$0xff]
    %v154 = vmul.f32 %v150, %v152
    %v155 = vmul.f32 %v151, %v153
    %156 = vst [vmem:[#allocation8] sm:$0xff] %v154
    %157 = vst [vmem:[#allocation8 + $0x8] sm:$0xff] %v155
    %v158 = vadd.f32 %v150, %v151
    %159 = vadd.xlane.f32.xlu0 %v158
    %v160 = vpop.xlane.xlu0 %159
    %v161 = vrot.slane %v160, 4
    %v162 = vadd.f32 %v160, %v161
    %v163 = vrot.slane %v162, 2
    %v164 = vadd.f32 %v162, %v163
    %v165 = vrot.slane %v164, 1
    %v166 = vadd.f32 %v164, %v165
    %s167 = vtos %v166
    %s168 = scalar_lea.smem [#allocation9], 0
    %169 = sst [smem:[%s168]] %s167
    // Predicated region
    $region18: #{tpu_custom_call.1} parent=1 // pred_check
      _
    $region19: #{tpu_custom_call.1} parent=1 // pred_check_branch
      %171 = sbr.rel (0) target = $region21
    $region20: #{tpu_custom_call.1} parent=1 // pred_region
      %173 = vsyncadd [#allocation4], 0
      %s175 = sshll.u32 [#allocation8], 4
      %s176 = int_to_ptr.vmem [resolvable:$true] %s175
      %s177 = sshll.u32 %s2, 4
      %s178 = int_to_ptr.hbm [resolvable:$true] %s177
      %180 = dma.vmem_to_hbm [thread:$0]  %s176, 256, %s178, [#allocation4]
    $region21: #{tpu_custom_call.1} parent=1 // pred_fallthru
      _
    // Predicated region
    $region22: #{tpu_custom_call.1} parent=1 // pred_check
      _
    $region23: #{tpu_custom_call.1} parent=1 // pred_check_branch
      %182 = sbr.rel (0) target = $region25
    $region24: #{tpu_custom_call.1} parent=1 // pred_region
      %184 = vsyncadd [#allocation5], 0
      %s186 = sshll.u32 %s3, 4
      %s187 = int_to_ptr.hbm [resolvable:$true] %s186
      %189 = dma.smem_to_hbm [#allocation9], 16, %s187, [#allocation5]
    $region25: #{tpu_custom_call.1} parent=1 // pred_fallthru
      _
    // Predicated region
    $region26: #{tpu_custom_call.1} parent=1 // pred_check
      _
    $region27: #{tpu_custom_call.1} parent=1 // pred_check_branch
      %191 = sbr.rel (0) target = $region29
    $region28: #{tpu_custom_call.1} parent=1 // pred_region
      %193 = dma.done [#allocation4], 256
    $region29: #{tpu_custom_call.1} parent=1 // pred_fallthru
      _
    // Predicated region
    $region30: #{tpu_custom_call.1} parent=1 // pred_check
      _
    $region31: #{tpu_custom_call.1} parent=1 // pred_check_branch
      %195 = sbr.rel (0) target = $region33
    $region32: #{tpu_custom_call.1} parent=1 // pred_region
      %197 = dma.done [#allocation5], 16
    $region33: #{tpu_custom_call.1} parent=1 // pred_fallthru
      _
    %198 = sfence
    %199 = vsyncpa [#allocation3], 1
    %200 = vsyncpa [#allocation7], 1
    %201 = vsyncpa [#allocation4], 1
    %202 = vsyncpa [#allocation5], 1

</llo_original>
